<compile_context>
chip_gen: v5e
topology: v5e:2x2
jax: 0.10.0
libtpu: 0.0.40
codegen_flags: <defaults>
</compile_context>

<pallas_src>
import functools
import math

import jax
import jax.numpy as jnp
from jax.experimental import pallas as pl
from jax.experimental.pallas import tpu as pltpu


# ----------------------------------------------------------------------------
# Small helpers
# ----------------------------------------------------------------------------

def _round_up(x, m):
    return ((x + m - 1) // m) * m


def _pick_bb(batch, lp, target_m=256):
    """Batch-tile size: target M = bb*Lp >= ~256, keep >=2 parallel steps (v7x)."""
    bb = max(1, min(batch, max(1, target_m // max(lp, 1))))
    while batch % bb != 0:
        bb -= 1
    if batch // bb < 2 <= batch:
        bb = max(1, batch // 2)
        while batch % bb != 0:
            bb -= 1
    return bb


def _layer_norm(x, w, b, eps=1e-5):
    mu = jnp.mean(x, axis=-1, keepdims=True)
    var = jnp.mean((x - mu) ** 2, axis=-1, keepdims=True)
    return (x - mu) * jax.lax.rsqrt(var + eps) * w + b


def _bmm(a, b, ca, cb):
    """Batched matmul, batch dim 0, contracting a-dim `ca` with b-dim `cb`."""
    return jax.lax.dot_general(
        a, b, (((ca,), (cb,)), ((0,), (0,))),
        preferred_element_type=jnp.float32)


# ----------------------------------------------------------------------------
# Pallas kernels
# ----------------------------------------------------------------------------

def dense_kernel(x_ref, w_ref, b_ref, o_ref):
    # x: (tm, Din), w: (Din, Dout) bf16, b: (1, Dout) f32 -> o: (tm, Dout)
    y = jnp.dot(x_ref[...].astype(jnp.bfloat16), w_ref[...],
                preferred_element_type=jnp.float32) + b_ref[...]
    o_ref[...] = y.astype(o_ref.dtype)


def dense_nobias_kernel(x_ref, w_ref, o_ref):
    y = jnp.dot(x_ref[...].astype(jnp.bfloat16), w_ref[...],
                preferred_element_type=jnp.float32)
    o_ref[...] = y.astype(o_ref.dtype)


def embed_kernel(x_ref, w_ref, b_ref, pos_ref, o_ref):
    # Patch embed with fused learned pos-embed add: (1, N, pd) @ (pd, D) + b + pos.
    y = (jnp.dot(x_ref[0].astype(jnp.bfloat16), w_ref[...],
                 preferred_element_type=jnp.float32)
         + b_ref[...] + pos_ref[0])
    o_ref[0] = y.astype(o_ref.dtype)


def transformer_stack_kernel(x_ref, wqkv_ref, bqkv_ref, wo_ref, bo_ref,
                             w1_ref, b1_ref, w2_ref, b2_ref,
                             ln1w_ref, ln1b_ref, ln2w_ref, ln2b_ref,
                             o_ref, *, num_heads, seq_len):
    """One grid step = one (batch-tile, layer) of a post-norm transformer stack.

    grid=(B//bb, num_layers).  The activation is the output block (resident in
    VMEM across the inner "arbitrary" layer axis).  Weight refs hold the FULL
    layer stack (constant index_map -> DMA'd once), indexed with ref[layer].
    """
    layer = pl.program_id(1)

    @pl.when(layer == 0)
    def _():
        o_ref[...] = x_ref[...]

    bb, Lp, D = o_ref.shape
    H = num_heads
    hd = D // H
    M = bb * Lp
    scale = 1.0 / math.sqrt(hd)

    x = o_ref[...].astype(jnp.float32).reshape(M, D)          # (M, D) f32

    # --- fused QKV projection: one lane-dense (M, D) @ (D, 3D) matmul ----------
    qkv = jnp.dot(x.astype(jnp.bfloat16), wqkv_ref[layer],
                  preferred_element_type=jnp.float32) + bqkv_ref[layer]   # (M, 3D)
    qkv3 = qkv.reshape(bb, Lp, 3 * D)

    def split_heads(part):
        # lane-dim slices of the fused projection stacked into the batch dim.
        base = part * D
        hs = jnp.stack([qkv3[:, :, base + h * hd: base + (h + 1) * hd]
                        for h in range(H)], axis=1)           # (bb, H, Lp, hd)
        return hs.reshape(bb * H, Lp, hd)

    q = split_heads(0) * scale                                # scale folded into q
    k = split_heads(1)
    v = split_heads(2)

    # --- attention: batched over (sample, head) --------------------------------
    s = _bmm(q, k, 2, 2)                                      # (bb*H, Lp, Lp)
    if Lp != seq_len:
        # mask padded key columns (tokens >= seq_len are zero-padding).
        col = jax.lax.broadcasted_iota(jnp.int32, (1, Lp, Lp), 2)
        s = jnp.where(col < seq_len, s, -1e30)
    s = s - jnp.max(s, axis=-1, keepdims=True)
    p = jnp.exp(s)
    p = p * pl.reciprocal(jnp.sum(p, axis=-1, keepdims=True), approx=False)

    ctx = _bmm(p.astype(jnp.bfloat16), v.astype(jnp.bfloat16), 2, 1)   # (bb*H, Lp, hd)

    # concat heads back to lane-dense (M, D), then ONE (M,D)@(D,D) out-projection
    ctx4 = ctx.reshape(bb, H, Lp, hd)
    ctx_m = jnp.concatenate([ctx4[:, h] for h in range(H)], axis=-1)   # (bb, Lp, D)
    ctx_m = ctx_m.reshape(M, D)
    attn = jnp.dot(ctx_m.astype(jnp.bfloat16), wo_ref[layer],
                   preferred_element_type=jnp.float32) + bo_ref[layer]  # (M, D)

    x1 = _layer_norm(x + attn, ln1w_ref[layer], ln1b_ref[layer])

    # --- feed-forward (bb folded into M) ----------------------------------------
    ff = jnp.dot(x1.astype(jnp.bfloat16), w1_ref[layer],
                 preferred_element_type=jnp.float32) + b1_ref[layer]
    ff = jnp.maximum(ff, 0.0)
    ff = jnp.dot(ff.astype(jnp.bfloat16), w2_ref[layer],
                 preferred_element_type=jnp.float32) + b2_ref[layer]

    x2 = _layer_norm(x1 + ff, ln2w_ref[layer], ln2b_ref[layer])
    o_ref[...] = x2.reshape(bb, Lp, D).astype(o_ref.dtype)


# ----------------------------------------------------------------------------
# Pallas wrappers
# ----------------------------------------------------------------------------

def dense(x, w, b=None, *, tm_target=512):
    """y = x @ w (+ b), batch flattened into the M dim and tiled over M.

    Output dim is zero-padded to a multiple of 128 so stores are lane-dense,
    then sliced back.
    """
    B, L, Din = x.shape
    Dout = w.shape[1]
    Dout_p = _round_up(Dout, 128)
    if Dout_p != Dout:
        w = jnp.pad(w, ((0, 0), (0, Dout_p - Dout)))
        if b is not None:
            b = jnp.pad(b, (0, Dout_p - Dout))
    M = B * L
    x2 = x.reshape(M, Din)
    tm = min(tm_target, M)
    grid = (pl.cdiv(M, tm),)
    out_shape = jax.ShapeDtypeStruct((M, Dout_p), x.dtype)
    cp = pltpu.CompilerParams(dimension_semantics=("parallel",))
    if b is None:
        y = pl.pallas_call(
            dense_nobias_kernel, out_shape=out_shape, grid=grid,
            in_specs=[pl.BlockSpec((tm, Din), lambda i: (i, 0)),
                      pl.BlockSpec((Din, Dout_p), lambda i: (0, 0))],
            out_specs=pl.BlockSpec((tm, Dout_p), lambda i: (i, 0)),
            compiler_params=cp,
        )(x2, w)
    else:
        y = pl.pallas_call(
            dense_kernel, out_shape=out_shape, grid=grid,
            in_specs=[pl.BlockSpec((tm, Din), lambda i: (i, 0)),
                      pl.BlockSpec((Din, Dout_p), lambda i: (0, 0)),
                      pl.BlockSpec((1, Dout_p), lambda i: (0, 0))],
            out_specs=pl.BlockSpec((tm, Dout_p), lambda i: (i, 0)),
            compiler_params=cp,
        )(x2, w, b.reshape(1, Dout_p))
    y = y.reshape(B, L, Dout_p)
    return y[..., :Dout] if Dout_p != Dout else y


def embed_tokens(patches, w, b, pos_embed):
    """Patch embedding with the pos-embed add fused into the same kernel."""
    B, N, pd = patches.shape
    D = w.shape[1]
    return pl.pallas_call(
        embed_kernel,
        out_shape=jax.ShapeDtypeStruct((B, N, D), patches.dtype),
        grid=(B,),
        in_specs=[pl.BlockSpec((1, N, pd), lambda b: (b, 0, 0)),
                  pl.BlockSpec((pd, D), lambda b: (0, 0)),
                  pl.BlockSpec((1, D), lambda b: (0, 0)),
                  pl.BlockSpec((1, N, D), lambda b: (0, 0, 0))],
        out_specs=pl.BlockSpec((1, N, D), lambda b: (b, 0, 0)),
        compiler_params=pltpu.CompilerParams(dimension_semantics=("parallel",)),
    )(patches, w, b.reshape(1, D), pos_embed)


_STACK_PARAM_NAMES = ("wqkv", "bqkv", "wo", "bo", "w1", "b1", "w2", "b2",
                      "ln1w", "ln1b", "ln2w", "ln2b")


def transformer_stack(x, p, num_heads):
    """Fused post-norm transformer encoder stack over tokens. x: (B, L, D)."""
    B, L, D = x.shape
    nl = p["wqkv"].shape[0]
    Lp = _round_up(L, 8)                       # sublane-align the token axis
    if Lp != L:
        x = jnp.pad(x, ((0, 0), (0, Lp - L), (0, 0)))
    bb = _pick_bb(B, Lp)
    kernel = functools.partial(transformer_stack_kernel,
                               num_heads=num_heads, seq_len=L)
    # NOTE: weight specs cover the full layer stack (constant index_map) so the
    # whole bf16 stack stays resident in VMEM; no per-batch-step weight re-DMA.
    # vmem_limit_bytes deliberately left at the per-generation scoped default
    # (plenty at these sizes; budget explicitly / stream per-layer on v7x).
    y = pl.pallas_call(
        kernel,
        out_shape=jax.ShapeDtypeStruct((B, Lp, D), x.dtype),
        grid=(B // bb, nl),
        in_specs=[pl.BlockSpec((bb, Lp, D), lambda b, l: (b, 0, 0))]
                 + [pl.BlockSpec(p[n].shape, lambda b, l: (0, 0, 0))
                    for n in _STACK_PARAM_NAMES],
        out_specs=pl.BlockSpec((bb, Lp, D), lambda b, l: (b, 0, 0)),
        compiler_params=pltpu.CompilerParams(
            dimension_semantics=("parallel", "arbitrary")),
    )(x, *[p[n] for n in _STACK_PARAM_NAMES])
    return y[:, :L, :] if Lp != L else y


# ----------------------------------------------------------------------------
# Plain-JAX glue (patchify, random masking, unshuffle)
# ----------------------------------------------------------------------------

def patchify(imgs, patch_size):
    """(B, 3, H, W) NCHW -> (B, N, 3*p*p) with (c, ph, pw) flattening per patch."""
    B, C, H, W = imgs.shape
    p = patch_size
    h, w = H // p, W // p
    x = imgs.reshape(B, C, h, p, w, p)
    x = x.transpose(0, 2, 4, 1, 3, 5)          # (B, h, w, C, p, p)
    return x.reshape(B, h * w, C * p * p)


def random_masking(x, mask_ratio, key):
    # TODO(synk): argsort / random permutation has no clean in-kernel Pallas
    # equivalent on TPU; done in plain JAX (matches torch.rand+argsort semantics).
    B, N, D = x.shape
    len_keep = int(N * (1 - mask_ratio))
    noise = jax.random.uniform(key, (B, N))
    ids_shuffle = jnp.argsort(noise, axis=1)
    ids_restore = jnp.argsort(ids_shuffle, axis=1)
    ids_keep = ids_shuffle[:, :len_keep]
    x_masked = jnp.take_along_axis(x, ids_keep[:, :, None], axis=1)
    mask = jnp.ones((B, N), x.dtype)
    mask = mask.at[:, :len_keep].set(0.0)
    mask = jnp.take_along_axis(mask, ids_restore, axis=1)
    return x_masked, mask, ids_restore


# ----------------------------------------------------------------------------
# Parameter init + full forward
# ----------------------------------------------------------------------------

def init_params(key, *, patch_dim, latent_dim, decoder_dim, num_patches,
                ffn_dim, num_heads, num_layers=4):
    keys = iter(jax.random.split(key, 64))

    def nrm(shape, dtype=jnp.bfloat16, scale=0.02):
        # MXU-operand weights in bf16 (f32 accumulation in the kernels).
        return (scale * jax.random.normal(next(keys), shape)).astype(dtype)

    def stack_params(d):
        nl = num_layers
        return dict(
            wqkv=nrm((nl, d, 3 * d)),                       # fused QKV, lane-dense
            bqkv=jnp.zeros((nl, 1, 3 * d), jnp.float32),
            wo=nrm((nl, d, d)),                             # single out-projection
            bo=jnp.zeros((nl, 1, d), jnp.float32),
            w1=nrm((nl, d, ffn_dim)),
            b1=jnp.zeros((nl, 1, ffn_dim), jnp.float32),
            w2=nrm((nl, ffn_dim, d)),
            b2=jnp.zeros((nl, 1, d), jnp.float32),
            ln1w=jnp.ones((nl, 1, d), jnp.float32),
            ln1b=jnp.zeros((nl, 1, d), jnp.float32),
            ln2w=jnp.ones((nl, 1, d), jnp.float32),
            ln2b=jnp.zeros((nl, 1, d), jnp.float32),
        )

    return dict(
        embed_w=nrm((patch_dim, latent_dim)),
        embed_b=jnp.zeros((latent_dim,), jnp.float32),
        pos_embed=nrm((1, num_patches, latent_dim), jnp.float32),
        encoder=stack_params(latent_dim),
        proj_w=nrm((latent_dim, decoder_dim)),              # Linear(bias=False)
        mask_token=jnp.zeros((1, 1, decoder_dim), jnp.float32),
        decoder=stack_params(decoder_dim),
        out_w=nrm((decoder_dim, patch_dim)),
        out_b=jnp.zeros((patch_dim,), jnp.float32),
    )


def masked_autoencoder_forward(imgs, params, *, mask_ratio, mask_key,
                               patch_size, num_heads=8):
    B = imgs.shape[0]
    decoder_dim = params["proj_w"].shape[1]

    # --- encoder ---------------------------------------------------------------
    patches = patchify(imgs, patch_size)                          # (B, N, patch_dim)
    tokens = embed_tokens(patches, params["embed_w"], params["embed_b"],
                          params["pos_embed"])                    # embed + pos fused

    x_masked, mask, ids_restore = random_masking(tokens, mask_ratio, mask_key)

    x_encoded = transformer_stack(x_masked, params["encoder"], num_heads)

    # --- decoder ---------------------------------------------------------------
    x_proj = dense(x_encoded, params["proj_w"])                   # Linear(bias=False)
    N = ids_restore.shape[1]
    L = x_proj.shape[1]
    mask_tokens = jnp.broadcast_to(params["mask_token"], (B, N - L, decoder_dim))
    x_full = jnp.concatenate([x_proj, mask_tokens], axis=1)       # (B, N, Ddec)
    # TODO(synk): fuse this unshuffle gather into the first decoder-stack step via
    # PrefetchScalarGridSpec + pl.Element row gather; kept in plain JAX for now.
    x_unshuffled = jnp.take_along_axis(
        x_full, ids_restore[:, :, None].astype(jnp.int32), axis=1)

    x_decoded = transformer_stack(x_unshuffled, params["decoder"], num_heads)
    x_recon = dense(x_decoded, params["out_w"], params["out_b"])  # (B, N, patch_dim)
    return x_recon, mask


# ----------------------------------------------------------------------------
# Demo
# ----------------------------------------------------------------------------

if __name__ == "__main__":
    key = jax.random.PRNGKey(0)
    k_img, k_param, k_mask = jax.random.split(key, 3)

    # Small, self-consistent shapes (scaled-down version of the module defaults).
    B = 2
    patch_size = 4
    img_size = (16, 16)
    latent_dim = 128
    decoder_dim = 128
    ffn_dim = 256          # scaled down from PyTorch default 2048
    num_heads = 8
    num_patches = (img_size[0] // patch_size) * (img_size[1] // patch_size)   # 16
    patch_dim = 3 * patch_size * patch_size                                   # 48

    imgs = jax.random.normal(k_img, (B, 3, img_size[0], img_size[1]), jnp.float32)
    params = init_params(k_param, patch_dim=patch_dim, latent_dim=latent_dim,
                         decoder_dim=decoder_dim, num_patches=num_patches,
                         ffn_dim=ffn_dim, num_heads=num_heads)

    x_recon, mask = masked_autoencoder_forward(
        imgs, params, mask_ratio=0.75, mask_key=k_mask,
        patch_size=patch_size, num_heads=num_heads)
    jax.block_until_ready((x_recon, mask))

    assert x_recon.shape == (B, num_patches, patch_dim), x_recon.shape
    assert mask.shape == (B, num_patches), mask.shape
    assert bool(jnp.all(jnp.isfinite(x_recon)))
    print("KERNEL_OK")
</pallas_src>

<mosaic_0001>
module attributes {stable_mosaic.version = 11 : i64} {
  func.func @embed_kernel(%arg0: i32, %arg1: memref<1x16x48xf32, #tpu.memory_space<vmem>>, %arg2: memref<48x128xbf16, #tpu.memory_space<vmem>>, %arg3: memref<1x128xf32, #tpu.memory_space<vmem>>, %arg4: memref<1x16x128xf32, #tpu.memory_space<vmem>>, %arg5: memref<1x16x128xf32, #tpu.memory_space<vmem>>) attributes {dimension_semantics = [#tpu.dimension_semantics<parallel>], iteration_bounds = array<i64: 2>, scalar_prefetch = 0 : i64, scratch_operands = 0 : i64, tpu.core_type = #tpu.core_type<tc>, window_params = [{transform_indices = @transform_0, window_bounds = array<i64: 1, 16, 48>}, {pipeline_mode = #tpu.pipeline_mode<synchronous>, transform_indices = @transform_1, window_bounds = array<i64: 48, 128>}, {pipeline_mode = #tpu.pipeline_mode<synchronous>, transform_indices = @transform_2, window_bounds = array<i64: 1, 128>}, {pipeline_mode = #tpu.pipeline_mode<synchronous>, transform_indices = @transform_3, window_bounds = array<i64: 1, 16, 128>}, {transform_indices = @transform_4, window_bounds = array<i64: 1, 16, 128>}]} {
    %c0 = arith.constant 0 : index
    %c0_0 = arith.constant 0 : index
    %c0_1 = arith.constant 0 : index
    %0 = vector.load %arg1[%c0, %c0_0, %c0_1] : memref<1x16x48xf32, #tpu.memory_space<vmem>>, vector<1x16x48xf32>
    %1 = vector.shape_cast %0 : vector<1x16x48xf32> to vector<16x48xf32>
    %2 = arith.truncf %1 : vector<16x48xf32> to vector<16x48xbf16>
    %c0_2 = arith.constant 0 : index
    %c0_3 = arith.constant 0 : index
    %3 = vector.load %arg2[%c0_2, %c0_3] : memref<48x128xbf16, #tpu.memory_space<vmem>>, vector<48x128xbf16>
    %cst = arith.constant dense<0.000000e+00> : vector<16x128xf32>
    %4 = tpu.matmul %2, %3, %cst {dimension_numbers = #tpu.dot_dimension_numbers<[1], [0], [0], [1], [0, 0, 1, 1], [], []>} : vector<16x48xbf16>, vector<48x128xbf16>, vector<16x128xf32> -> vector<16x128xf32>
    %c0_4 = arith.constant 0 : index
    %c0_5 = arith.constant 0 : index
    %5 = vector.load %arg3[%c0_4, %c0_5] : memref<1x128xf32, #tpu.memory_space<vmem>>, vector<1x128xf32>
    %6 = vector.broadcast %5 : vector<1x128xf32> to vector<16x128xf32>
    %7 = arith.addf %4, %6 : vector<16x128xf32>
    %c0_6 = arith.constant 0 : index
    %c0_7 = arith.constant 0 : index
    %c0_8 = arith.constant 0 : index
    %8 = vector.load %arg4[%c0_6, %c0_7, %c0_8] : memref<1x16x128xf32, #tpu.memory_space<vmem>>, vector<1x16x128xf32>
    %9 = vector.shape_cast %8 : vector<1x16x128xf32> to vector<16x128xf32>
    %10 = arith.addf %7, %9 : vector<16x128xf32>
    %c0_9 = arith.constant 0 : index
    %c0_10 = arith.constant 0 : index
    %c0_11 = arith.constant 0 : index
    %11 = vector.load %arg5[%c0_9, %c0_10, %c0_11] : memref<1x16x128xf32, #tpu.memory_space<vmem>>, vector<1x16x128xf32>
    %12 = vector.shape_cast %11 : vector<1x16x128xf32> to vector<16x128xf32>
    %13 = vector.shape_cast %10 : vector<16x128xf32> to vector<1x16x128xf32>
    tpu.vector_store %arg5[%c0_9, %c0_10, %c0_11], %13 {strides = array<i32>} : memref<1x16x128xf32, #tpu.memory_space<vmem>>, vector<1x16x128xf32>,
    return
  }
  func.func @transform_0(%arg0: i32) -> (i32, i32, i32) {
    %c0_i32 = arith.constant 0 : i32
    %c0_i32_0 = arith.constant 0 : i32
    %c0_i32_1 = arith.constant 0 : i32
    return %arg0, %c0_i32, %c0_i32_0 : i32, i32, i32
  }
  func.func @transform_1(%arg0: i32) -> (i32, i32) {
    %c0_i32 = arith.constant 0 : i32
    %c0_i32_0 = arith.constant 0 : i32
    %c0_i32_1 = arith.constant 0 : i32
    return %c0_i32, %c0_i32_0 : i32, i32
  }
  func.func @transform_2(%arg0: i32) -> (i32, i32) {
    %c0_i32 = arith.constant 0 : i32
    %c0_i32_0 = arith.constant 0 : i32
    %c0_i32_1 = arith.constant 0 : i32
    return %c0_i32, %c0_i32_0 : i32, i32
  }
  func.func @transform_3(%arg0: i32) -> (i32, i32, i32) {
    %c0_i32 = arith.constant 0 : i32
    %c0_i32_0 = arith.constant 0 : i32
    %c0_i32_1 = arith.constant 0 : i32
    %c0_i32_2 = arith.constant 0 : i32
    return %c0_i32, %c0_i32_0, %c0_i32_1 : i32, i32, i32
  }
  func.func @transform_4(%arg0: i32) -> (i32, i32, i32) {
    %c0_i32 = arith.constant 0 : i32
    %c0_i32_0 = arith.constant 0 : i32
    %c0_i32_1 = arith.constant 0 : i32
    return %arg0, %c0_i32, %c0_i32_0 : i32, i32, i32
  }
}

</mosaic_0001>

<llo_original>
// kernel: tpu_custom_call.1
$region0: #{tpu_custom_call.1}
  #allocation0 [shape = 'u32[]', space=smem, size = 0x4, offset = 0x4, fixed_abs, tag = 'smem constant byte address 0x4 - core index']
  #allocation1 [shape = 'u32[72,128]{1,0:T(1,128)}', space=vmem, size = 0x9000, scoped, tag = 'internal scratch']
  %s0 = inlined_call_operand.hbm [shape: f32[2,16,48], index: 0, kind: input, shape index: {}]
  %s1 = inlined_call_operand.hbm [shape: bf16[48,128], index: 1, kind: input, shape index: {}]
  %s2 = inlined_call_operand.vmem [shape: f32[1,128], index: 2, kind: input, shape index: {}]
  %s3 = inlined_call_operand.hbm [shape: f32[1,16,128], index: 3, kind: input, shape index: {}]
  %s4 = inlined_call_operand.hbm [shape: f32[2,16,128], index: 4, kind: output, shape index: {}]
  %s5 = sld [smem:[#allocation0]]
  $region61: #{tpu_custom_call.1} parent=0
    _
  %s7 = ssub.s32 1, %s5
  %s8 = scalar_select 0, %s7, %s5
  $region1: #{tpu_custom_call.1} parent=0
    #allocation2 [shape = 'u8[16384]{0}', space=vmem, size = 0x4000, scoped, tag = 'input window, operand 0']
    #allocation3 [shape = 's32[2]{0}', space=sflag, size = 0x8, scoped, tag = 'scoped memory for tpu_custom_call.1']
    #allocation4 [shape = 's32[2]{0}', space=sflag, size = 0x8, scoped, tag = 'scoped memory for tpu_custom_call.1']
    #allocation5 [shape = 'u8[12288]{0}', space=vmem, size = 0x3000, scoped, tag = 'input window, operand 1, single buffered']
    #allocation6 [shape = 's32[1]{0}', space=sflag, size = 0x4, scoped, tag = 'scoped memory for tpu_custom_call.1']
    #allocation7 [shape = 'u8[8192]{0}', space=vmem, size = 0x2000, scoped, tag = 'input window, operand 3, single buffered']
    #allocation8 [shape = 'u8[16384]{0}', space=vmem, size = 0x4000, scoped, tag = 'output window, operand 0']
    %9 = vsyncpa [#allocation3], 0
    %s10 = scalar_lea.sflag [#allocation3], 1
    %11 = vsyncpa %s10, 0
    %12 = vsyncpa [#allocation6], 0
    %13 = vsyncpa [#allocation4], 0
    %s14 = scalar_lea.sflag [#allocation4], 1
    %15 = vsyncpa %s14, 0
    loop: start=0, step=1, limit=4
    $region2: #{tpu_custom_call.1} parent=1 // loop_pre_header
      _
    $region3: #{tpu_custom_call.1} parent=1 // loop_header
      %s17 = sphi 0, %s21
      %p18 = scmp.ge.s32.totalorder %s17, 4
      %s27 = sphi 0, %s29
      %s30 = sphi 0, %s27
      %s31 = sphi 0, %s30
      %s47 = sphi 0, %s31
      %s51 = sphi 0, %s51
      %s53 = sphi 0, %s51
      %s54 = sphi 0, %s53
      %s68 = sphi 0, %s54
      %s72 = sphi 0, %s72
      %s74 = sphi 0, %s72
      %s75 = sphi 0, %s74
      %s89 = sphi 0, %s75
      %s93 = sphi 0, %s93
      %s95 = sphi 0, %s93
      %s96 = sphi 0, %s95
      %s110 = sphi 0, %s96
      %s116 = sphi 0, %s118
      %s119 = sphi 0, %s116
      %s120 = sphi 0, %s119
      %s136 = sphi 0, %s120
    $region4: #{tpu_custom_call.1} parent=1 // loop_header_branch
      %20 = sbr.rel (%p18) target = $region8
    $region5: #{tpu_custom_call.1} parent=1 // loop_body
      %s22 = ssub.s32 %s17, 1
      %s23 = ssub.s32 %s17, 2
      %s24 = sadd.s32 %s17, 1
      %s25 = ssub.s32 %s17, %s24
      %p26 = scmp.eq.s32.totalorder %s25, 0
      %s28 = sadd.s32 %s27, 1
      %s29 = scalar_select %p26, %s27, %s28
      %p32 = pneg %p26
      %p33 = scmp.eq.s32.totalorder %s17, 1
      %p34 = por %p32, %p33
      %p35 = scmp.ne.s32.totalorder %s27, %s30
      %p36 = scmp.eq.s32.totalorder %s17, 0
      %p37 = por %p35, %p36
      %p38 = scmp.ne.s32.totalorder %s27, %s30
      %p39 = scmp.eq.s32.totalorder %s22, 1
      %p40 = por %p38, %p39
      %p41 = scmp.ne.s32.totalorder %s30, %s31
      %p42 = scmp.eq.s32.totalorder %s22, 0
      %p43 = por %p41, %p42
      %p44 = scmp.ne.s32.totalorder %s30, %s31
      %p45 = scmp.eq.s32.totalorder %s23, 1
      %p46 = por %p44, %p45
      %p48 = scmp.ne.s32.totalorder %s31, %s47
      %p49 = scmp.eq.s32.totalorder %s23, 0
      %p50 = por %p48, %p49
      %s52 = sadd.s32 %s51, 1
      %p55 = scmp.eq.s32.totalorder %s17, 1
      %p56 = scmp.ne.s32.totalorder %s51, %s53
      %p57 = scmp.eq.s32.totalorder %s17, 0
      %p58 = por %p56, %p57
      %p59 = scmp.ne.s32.totalorder %s51, %s53
      %p60 = scmp.eq.s32.totalorder %s22, 1
      %p61 = por %p59, %p60
      %p62 = scmp.ne.s32.totalorder %s53, %s54
      %p63 = scmp.eq.s32.totalorder %s22, 0
      %p64 = por %p62, %p63
      %p65 = scmp.ne.s32.totalorder %s53, %s54
      %p66 = scmp.eq.s32.totalorder %s23, 1
      %p67 = por %p65, %p66
      %p69 = scmp.ne.s32.totalorder %s54, %s68
      %p70 = scmp.eq.s32.totalorder %s23, 0
      %p71 = por %p69, %p70
      %s73 = sadd.s32 %s72, 1
      %p76 = scmp.eq.s32.totalorder %s17, 1
      %p77 = scmp.ne.s32.totalorder %s72, %s74
      %p78 = scmp.eq.s32.totalorder %s17, 0
      %p79 = por %p77, %p78
      %p80 = scmp.ne.s32.totalorder %s72, %s74
      %p81 = scmp.eq.s32.totalorder %s22, 1
      %p82 = por %p80, %p81
      %p83 = scmp.ne.s32.totalorder %s74, %s75
      %p84 = scmp.eq.s32.totalorder %s22, 0
      %p85 = por %p83, %p84
      %p86 = scmp.ne.s32.totalorder %s74, %s75
      %p87 = scmp.eq.s32.totalorder %s23, 1
      %p88 = por %p86, %p87
      %p90 = scmp.ne.s32.totalorder %s75, %s89
      %p91 = scmp.eq.s32.totalorder %s23, 0
      %p92 = por %p90, %p91
      %s94 = sadd.s32 %s93, 1
      %p97 = scmp.eq.s32.totalorder %s17, 1
      %p98 = scmp.ne.s32.totalorder %s93, %s95
      %p99 = scmp.eq.s32.totalorder %s17, 0
      %p100 = por %p98, %p99
      %p101 = scmp.ne.s32.totalorder %s93, %s95
      %p102 = scmp.eq.s32.totalorder %s22, 1
      %p103 = por %p101, %p102
      %p104 = scmp.ne.s32.totalorder %s95, %s96
      %p105 = scmp.eq.s32.totalorder %s22, 0
      %p106 = por %p104, %p105
      %p107 = scmp.ne.s32.totalorder %s95, %s96
      %p108 = scmp.eq.s32.totalorder %s23, 1
      %p109 = por %p107, %p108
      %p111 = scmp.ne.s32.totalorder %s96, %s110
      %p112 = scmp.eq.s32.totalorder %s23, 0
      %p113 = por %p111, %p112
      %s114 = ssub.s32 %s17, %s24
      %p115 = scmp.eq.s32.totalorder %s114, 0
      %s117 = sadd.s32 %s116, 1
      %s118 = scalar_select %p115, %s116, %s117
      %p121 = pneg %p115
      %p122 = scmp.eq.s32.totalorder %s17, 1
      %p123 = por %p121, %p122
      %p124 = scmp.ne.s32.totalorder %s116, %s119
      %p125 = scmp.eq.s32.totalorder %s17, 0
      %p126 = por %p124, %p125
      %p127 = scmp.ne.s32.totalorder %s116, %s119
      %p128 = scmp.eq.s32.totalorder %s22, 1
      %p129 = por %p127, %p128
      %p130 = scmp.ne.s32.totalorder %s119, %s120
      %p131 = scmp.eq.s32.totalorder %s22, 0
      %p132 = por %p130, %p131
      %p133 = scmp.ne.s32.totalorder %s119, %s120
      %p134 = scmp.eq.s32.totalorder %s23, 1
      %p135 = por %p133, %p134
      %p137 = scmp.ne.s32.totalorder %s120, %s136
      %p138 = scmp.eq.s32.totalorder %s23, 0
      %p139 = por %p137, %p138
      %p140 = scmp.le.s32.totalorder 1, %s17
      %p141 = scmp.lt.s32.totalorder %s17, 3
      %p142 = pnand %p140, %p141
      %p143 = pneg %p142
      // Predicated region
      $region9: #{tpu_custom_call.1} parent=5 // pred_check
        _
      $region10: #{tpu_custom_call.1} parent=5 // pred_check_branch
        %145 = sbr.rel (%p142) target = $region12
      $region11: #{tpu_custom_call.1} parent=5 // pred_region
        %s146 = ssub.s32 %s17, 1
        // Predicated region
        $region13: #{tpu_custom_call.1} parent=11 // pred_check
          %p147 = pneg %p64
        $region14: #{tpu_custom_call.1} parent=11 // pred_check_branch
          %149 = sbr.rel (%p147) target = $region16
        $region15: #{tpu_custom_call.1} parent=11 // pred_region
          %151 = vsyncadd [#allocation6], 0
          %s152 = sshll.u32 %s1, 4
          %s153 = int_to_ptr.hbm [resolvable:$true] %s152
          %s154 = sshll.u32 [#allocation5], 4
          %s155 = int_to_ptr.vmem [resolvable:$true] %s154
          %160 = dma.hbm_to_vmem [thread:$0]  %s153, 384, %s155, [#allocation6], 64, 64, 4
        $region16: #{tpu_custom_call.1} parent=11 // pred_fallthru
          _
        // Predicated region
        $region17: #{tpu_custom_call.1} parent=11 // pred_check
          %p161 = pneg %p85
        $region18: #{tpu_custom_call.1} parent=11 // pred_check_branch
          %163 = sbr.rel (%p161) target = $region20
        $region19: #{tpu_custom_call.1} parent=11 // pred_region
          _
        $region20: #{tpu_custom_call.1} parent=11 // pred_fallthru
          _
        // Predicated region
        $region21: #{tpu_custom_call.1} parent=11 // pred_check
          %p164 = pneg %p106
        $region22: #{tpu_custom_call.1} parent=11 // pred_check_branch
          %166 = sbr.rel (%p164) target = $region24
        $region23: #{tpu_custom_call.1} parent=11 // pred_region
          %168 = vsyncadd [#allocation6], 0
          %s169 = sshll.u32 %s3, 4
          %s170 = int_to_ptr.hbm [resolvable:$true] %s169
          %s171 = sshll.u32 [#allocation7], 4
          %s172 = int_to_ptr.vmem [resolvable:$true] %s171
          %177 = dma.hbm_to_vmem [thread:$0]  %s170, 256, %s172, [#allocation6], 128, 128, 8
        $region24: #{tpu_custom_call.1} parent=11 // pred_fallthru
          _
      $region12: #{tpu_custom_call.1} parent=5 // pred_fallthru
        _
      %p178 = scmp.lt.s32.totalorder %s17, 2
      // Predicated region
      $region25: #{tpu_custom_call.1} parent=5 // pred_check
        %p179 = pneg %p178
      $region26: #{tpu_custom_call.1} parent=5 // pred_check_branch
        %181 = sbr.rel (%p179) target = $region28
      $region27: #{tpu_custom_call.1} parent=5 // pred_region
        // Predicated region
        $region29: #{tpu_custom_call.1} parent=27 // pred_check
          %p182 = pneg %p37
        $region30: #{tpu_custom_call.1} parent=27 // pred_check_branch
          %184 = sbr.rel (%p182) target = $region32
        $region31: #{tpu_custom_call.1} parent=27 // pred_region
          %s185 = sand.u32 %s27, 1
          %s186 = scalar_lea.sflag [#allocation3], %s185
          %s187 = sand.u32 %s27, 1
          %s188 = smul.addr %s187, 16
          %s189 = scalar_lea.vmem [#allocation2], %s188
          %191 = vsyncadd %s186, 0
          %s192 = smul.addr %s17, 2
          %s193 = smul.addr %s192, 8
          %s194 = scalar_lea.hbm %s0, %s193
          %s195 = sshll.u32 %s194, 4
          %s196 = int_to_ptr.hbm [resolvable:$true] %s195
          %s197 = sshll.u32 %s189, 4
          %s198 = int_to_ptr.vmem [resolvable:$true] %s197
          %203 = dma.hbm_to_vmem [thread:$0]  %s196, 256, %s198, %s186, 128, 128, 8
        $region32: #{tpu_custom_call.1} parent=27 // pred_fallthru
          _
      $region28: #{tpu_custom_call.1} parent=5 // pred_fallthru
        _
      %p204 = scmp.le.s32.totalorder 1, %s17
      %p205 = scmp.lt.s32.totalorder %s17, 3
      %p206 = pnand %p204, %p205
      %p207 = pneg %p206
      // Predicated region
      $region33: #{tpu_custom_call.1} parent=5 // pred_check
        _
      $region34: #{tpu_custom_call.1} parent=5 // pred_check_branch
        %209 = sbr.rel (%p206) target = $region36
      $region35: #{tpu_custom_call.1} parent=5 // pred_region
        %s210 = ssub.s32 %s17, 1
        %s211 = sand.u32 %s30, 1
        %s212 = scalar_lea.sflag [#allocation3], %s211
        %s213 = sand.u32 %s30, 1
        %s214 = smul.addr %s213, 16
        %s215 = scalar_lea.vmem [#allocation2], %s214
        // Predicated region
        $region37: #{tpu_custom_call.1} parent=35 // pred_check
          %p216 = pneg %p43
        $region38: #{tpu_custom_call.1} parent=35 // pred_check_branch
          %218 = sbr.rel (%p216) target = $region40
        $region39: #{tpu_custom_call.1} parent=35 // pred_region
          %220 = dma.done %s212, 256
        $region40: #{tpu_custom_call.1} parent=35 // pred_fallthru
          _
        // Predicated region
        $region41: #{tpu_custom_call.1} parent=35 // pred_check
          %p221 = pneg %p64
        $region42: #{tpu_custom_call.1} parent=35 // pred_check_branch
          %223 = sbr.rel (%p221) target = $region44
        $region43: #{tpu_custom_call.1} parent=35 // pred_region
          %225 = dma.done [#allocation6], 384
        $region44: #{tpu_custom_call.1} parent=35 // pred_fallthru
          _
        // Predicated region
        $region45: #{tpu_custom_call.1} parent=35 // pred_check
          %p226 = pneg %p106
        $region46: #{tpu_custom_call.1} parent=35 // pred_check_branch
          %228 = sbr.rel (%p226) target = $region48
        $region47: #{tpu_custom_call.1} parent=35 // pred_region
          %230 = dma.done [#allocation6], 256
        $region48: #{tpu_custom_call.1} parent=35 // pred_fallthru
          _
        %s231 = sand.u32 %s30, 1
        %s232 = scalar_lea.sflag [#allocation3], %s231
        %s233 = sand.u32 %s30, 1
        %s234 = smul.addr %s233, 16
        %s235 = scalar_lea.vmem [#allocation2], %s234
        %p236 = pneg %p43
        %p237 = pneg %p40
        %p238 = pneg %p64
        %p239 = pneg %p61
        %p240 = pneg %p85
        %p241 = pneg %p82
        %p242 = pneg %p106
        %p243 = pneg %p103
        %p244 = pneg %p132
        %p245 = pneg %p129
        %s246 = sand.u32 %s119, 1
        %s247 = scalar_lea.sflag [#allocation4], %s246
        %s248 = sand.u32 %s119, 1
        %s249 = smul.addr %s248, 16
        %s250 = scalar_lea.vmem [#allocation8], %s249
        %v252 = vld [vmem:[%s215] sm:$0xff]
        %v253 = vld [vmem:[%s215 + $0x8] sm:$0xff]
        %v254 = vpack.c.bf16 %v253, %v252
        %v255 = vld [vmem:[#allocation5] sm:$0xf]
        %v256 = vld [vmem:[#allocation5 + $0x4] sm:$0xf]
        %v257 = vld [vmem:[#allocation5 + $0x8] sm:$0xf]
        %v258 = vld [vmem:[#allocation5 + $0xc] sm:$0xf]
        %v259 = vld [vmem:[#allocation5 + $0x10] sm:$0xf]
        %v260 = vld [vmem:[#allocation5 + $0x14] sm:$0xf]
        %v261 = vld [vmem:[%s2] sm:$0x1]
        %v263 = vperm.slane %v261, 0
        %v271 = vunpack.c.l.b16 %v255
        %v272 = vunpack.c.l.b16 %v256
        %v273 = vunpack.c.l.b16 %v257
        %v274 = vunpack.c.l.b16 %v258
        %v275 = vunpack.c.l.b16 %v259
        %v276 = vunpack.c.l.b16 %v260
        %v277 = vpack.c.b16 %v272, %v271
        %v278 = vpack.c.b16 %v274, %v273
        %v279 = vpack.c.b16 %v276, %v275
        %vm283 = vcmask 392192
        %v285 = vsel %vm283, %v254, 0
        %287 = vmatpush.bf16.msra.mxu0 0
        %288 = vmatpush.bf16.msra.mxu0 0
        %289 = vmatpush.bf16.msra.mxu0 0
        %290 = vmatpush.bf16.msra.mxu0 0
        %291 = vmatpush.bf16.msra.mxu0 0
        %292 = vmatpush.bf16.msra.mxu0 %v279
        %293 = vmatpush.bf16.msra.mxu0 %v278
        %294 = vmatpush.bf16.msra.mxu0 %v277
        %295 = vmatmul.bf16.gmra.mxu0 %v285
        %v296 = vpop.f32.mrf.mxu0
        %v297 = vadd.f32 %v263, %v296
        %v298 = vpop.f32.mrf.mxu0
        %v299 = vadd.f32 %v263, %v298
        %300 = vdwg.mxu0
        %v301 = vld [vmem:[#allocation7] sm:$0xff]
        %v302 = vld [vmem:[#allocation7 + $0x8] sm:$0xff]
        %v303 = vadd.f32 %v297, %v301
        %v304 = vadd.f32 %v299, %v302
        %305 = vst [vmem:[%s250] sm:$0xff] %v303
        %306 = vst [vmem:[%s250 + $0x8] sm:$0xff] %v304
        %s307 = sand.u32 %s119, 1
        %s308 = scalar_lea.sflag [#allocation4], %s307
        %s309 = sand.u32 %s119, 1
        %s310 = smul.addr %s309, 16
        %s311 = scalar_lea.vmem [#allocation8], %s310
        // Predicated region
        $region49: #{tpu_custom_call.1} parent=35 // pred_check
          %p312 = pneg %p129
        $region50: #{tpu_custom_call.1} parent=35 // pred_check_branch
          %314 = sbr.rel (%p312) target = $region52
        $region51: #{tpu_custom_call.1} parent=35 // pred_region
          %316 = vsyncadd %s308, 0
          %s317 = smul.addr %s22, 2
          %s318 = smul.addr %s317, 8
          %s319 = scalar_lea.hbm %s4, %s318
          %s320 = sshll.u32 %s311, 4
          %s321 = int_to_ptr.vmem [resolvable:$true] %s320
          %s322 = sshll.u32 %s319, 4
          %s323 = int_to_ptr.hbm [resolvable:$true] %s322
          %328 = dma.vmem_to_hbm [thread:$0]  %s321, 256, %s323, %s308, 128, 128, 8
        $region52: #{tpu_custom_call.1} parent=35 // pred_fallthru
          _
      $region36: #{tpu_custom_call.1} parent=5 // pred_fallthru
        _
      %p329 = scmp.le.s32.totalorder 2, %s17
      // Predicated region
      $region53: #{tpu_custom_call.1} parent=5 // pred_check
        %p330 = pneg %p329
      $region54: #{tpu_custom_call.1} parent=5 // pred_check_branch
        %332 = sbr.rel (%p330) target = $region56
      $region55: #{tpu_custom_call.1} parent=5 // pred_region
        %s333 = ssub.s32 %s17, 2
        // Predicated region
        $region57: #{tpu_custom_call.1} parent=55 // pred_check
          %p334 = pneg %p135
        $region58: #{tpu_custom_call.1} parent=55 // pred_check_branch
          %336 = sbr.rel (%p334) target = $region60
        $region59: #{tpu_custom_call.1} parent=55 // pred_region
          %s337 = sand.u32 %s120, 1
          %s338 = scalar_lea.sflag [#allocation4], %s337
          %s339 = sand.u32 %s120, 1
          %s340 = smul.addr %s339, 16
          %s341 = scalar_lea.vmem [#allocation8], %s340
          %343 = dma.done %s338, 256
        $region60: #{tpu_custom_call.1} parent=55 // pred_fallthru
          _
      $region56: #{tpu_custom_call.1} parent=5 // pred_fallthru
        _
    $region6: #{tpu_custom_call.1} parent=1 // loop_footer
      %s21 = sadd.s32 1, %s17
    $region7: #{tpu_custom_call.1} parent=1 // loop_footer_branch
      %16 = sbr.rel target = $region3
    $region8: #{tpu_custom_call.1} parent=1 // loop_exit
      _
    %344 = vsyncpa [#allocation3], 1
    %s345 = scalar_lea.sflag [#allocation3], 1
    %346 = vsyncpa %s345, 1
    %347 = vsyncpa [#allocation6], 1
    %348 = vsyncpa [#allocation4], 1
    %s349 = scalar_lea.sflag [#allocation4], 1
    %350 = vsyncpa %s349, 1

</llo_original>
